<compile_context>
chip_gen: v7x
topology: tpu7x:2x2x1
jax: 0.10.0
libtpu: 0.0.40
codegen_flags: <defaults>
</compile_context>

<pallas_src>
import jax
import jax.numpy as jnp
from jax.experimental import pallas as pl
from jax.experimental.pallas import tpu as pltpu


def cnn_tagger_kernel(ids_ref, emb_ref, wc_ref, bc_ref, wl_ref, bl_ref, o_ref,
                      emb_scratch):
    # ids_ref    : (L,)       int32, SMEM  -- token ids
    # emb_ref    : (V, E)     f32,   VMEM  -- embedding table
    # wc_ref     : (K, E, H)  f32,   VMEM  -- conv weights, matmul-ready
    # bc_ref     : (1, H)     f32,   VMEM  -- conv bias
    # wl_ref     : (H, T)     f32,   VMEM  -- hidden2tag weights (transposed)
    # bl_ref     : (1, T)     f32,   VMEM  -- hidden2tag bias
    # o_ref      : (L_out, T) f32,   VMEM  -- log-softmax tag scores
    # emb_scratch: (L, E)     f32,   VMEM scratch -- gathered embeddings
    L, _ = emb_scratch.shape
    K = wc_ref.shape[0]
    L_out, _ = o_ref.shape

    # --- fused embedding gather (exact): scalar id from SMEM -> dynamic row
    #     slice of the VMEM table.  L is small & static, so unroll.
    for l in range(L):
        idx = ids_ref[l]
        emb_scratch[pl.ds(l, 1), :] = emb_ref[pl.ds(idx, 1), :]
    embeds = emb_scratch[...]                                   # (L, E)

    # --- Conv2d(1, H, (K, E)) over the (L, E) map == sum of K shifted matmuls
    #     on the MXU; no K-fold im2col duplication of the activations.
    h = jnp.dot(embeds[0:L_out, :], wc_ref[0],
                preferred_element_type=jnp.float32)
    for k in range(1, K):
        h = h + jnp.dot(embeds[k:k + L_out, :], wc_ref[k],
                        preferred_element_type=jnp.float32)
    h = jnp.maximum(h + bc_ref[...], 0.0)                       # bias + ReLU -> (L_out, H)

    # --- hidden2tag linear
    t = jnp.dot(h, wl_ref[...], preferred_element_type=jnp.float32) + bl_ref[...]

    # --- log_softmax over the tag axis (XLU reductions + EUP exp/log)
    m = jnp.max(t, axis=-1, keepdims=True)
    s = t - m
    lse = jnp.log(jnp.sum(jnp.exp(s), axis=-1, keepdims=True))
    o_ref[...] = (s - lse).astype(o_ref.dtype)


def prepare_params(params):
    """One-time layout prep: matmul-ready weights (avoids per-call transposes)."""
    w_conv = params["conv_w"]                       # (H, 1, K, E)  PyTorch layout
    H, _, K, E = w_conv.shape
    T = params["lin_w"].shape[0]
    return {
        "embedding": params["embedding"],                           # (V, E)
        "conv_w_keh": jnp.transpose(w_conv[:, 0], (1, 2, 0)),       # (K, E, H)
        "conv_b_1h": params["conv_b"].reshape(1, H),                # (1, H)
        "lin_w_ht": jnp.transpose(params["lin_w"]),                 # (H, T)
        "lin_b_1t": params["lin_b"].reshape(1, T),                  # (1, T)
    }


@jax.jit
def cnn_model_forward(sample, prepared):
    """sample: (L,) int token ids. Returns (L - K + 1, tagset_size) log-probs."""
    emb = prepared["embedding"]
    wc = prepared["conv_w_keh"]
    bc = prepared["conv_b_1h"]
    wl = prepared["lin_w_ht"]
    bl = prepared["lin_b_1t"]

    L = sample.shape[0]
    K, E, H = wc.shape
    T = wl.shape[1]
    L_out = L - K + 1
    ids = sample.astype(jnp.int32)

    return pl.pallas_call(
        cnn_tagger_kernel,
        out_shape=jax.ShapeDtypeStruct((L_out, T), jnp.float32),
        in_specs=[
            pl.BlockSpec(memory_space=pltpu.MemorySpace.SMEM),   # token ids
            pl.BlockSpec(memory_space=pltpu.MemorySpace.VMEM),   # embedding table
            pl.BlockSpec(memory_space=pltpu.MemorySpace.VMEM),   # conv weights (K,E,H)
            pl.BlockSpec(memory_space=pltpu.MemorySpace.VMEM),   # conv bias (1,H)
            pl.BlockSpec(memory_space=pltpu.MemorySpace.VMEM),   # linear weights (H,T)
            pl.BlockSpec(memory_space=pltpu.MemorySpace.VMEM),   # linear bias (1,T)
        ],
        out_specs=pl.BlockSpec(memory_space=pltpu.MemorySpace.VMEM),
        scratch_shapes=[pltpu.VMEM((L, E), jnp.float32)],
    )(ids, emb, wc, bc, wl, bl)


def init_params(key, vocab_size, embedding_dim, kernel_size, hidden_dim, tagset_size):
    k0, k1, k2, k3, k4 = jax.random.split(key, 5)
    fan_in_conv = 1 * kernel_size * embedding_dim
    fan_in_lin = hidden_dim
    bound_c = 1.0 / jnp.sqrt(fan_in_conv)
    bound_l = 1.0 / jnp.sqrt(fan_in_lin)
    return {
        "embedding": jax.random.normal(k0, (vocab_size, embedding_dim), jnp.float32),
        "conv_w": jax.random.uniform(
            k1, (hidden_dim, 1, kernel_size, embedding_dim), jnp.float32, -bound_c, bound_c),
        "conv_b": jax.random.uniform(k2, (hidden_dim,), jnp.float32, -bound_c, bound_c),
        "lin_w": jax.random.uniform(
            k3, (tagset_size, hidden_dim), jnp.float32, -bound_l, bound_l),
        "lin_b": jax.random.uniform(k4, (tagset_size,), jnp.float32, -bound_l, bound_l),
    }


if __name__ == "__main__":
    # Small shapes consistent with the module's forward.
    vocab_size = 50
    embedding_dim = 16
    kernel_size = 2
    hidden_dim = 32
    tagset_size = 8
    seq_len = 16

    key = jax.random.PRNGKey(0)
    pkey, skey = jax.random.split(key)
    params = init_params(pkey, vocab_size, embedding_dim, kernel_size, hidden_dim, tagset_size)
    prepared = prepare_params(params)
    sample = jax.random.randint(skey, (seq_len,), 0, vocab_size, dtype=jnp.int32)

    out = cnn_model_forward(sample, prepared)
    out = jax.block_until_ready(out)

    # Reference in plain JAX (mirrors the PyTorch module forward).
    embeds = jnp.take(params["embedding"], sample, axis=0)
    L_out = seq_len - kernel_size + 1
    x = jnp.stack([embeds[k:k + L_out] for k in range(kernel_size)], axis=1).reshape(L_out, -1)
    conv = x @ params["conv_w"].reshape(hidden_dim, -1).T + params["conv_b"]
    conv = jnp.maximum(conv, 0.0)
    tags = conv @ params["lin_w"].T + params["lin_b"]
    ref = jax.nn.log_softmax(tags, axis=1)

    assert out.shape == (L_out, tagset_size)
    assert jnp.allclose(out, ref, atol=1e-5, rtol=1e-5), float(jnp.max(jnp.abs(out - ref)))
    print("KERNEL_OK")
</pallas_src>

<mosaic_0001>
module attributes {stable_mosaic.version = 11 : i64} {
  func.func @cnn_tagger_kernel(%arg0: memref<16xi32, #tpu.memory_space<smem>>, %arg1: memref<50x16xf32, #tpu.memory_space<vmem>>, %arg2: memref<2x16x32xf32, #tpu.memory_space<vmem>>, %arg3: memref<1x32xf32, #tpu.memory_space<vmem>>, %arg4: memref<32x8xf32, #tpu.memory_space<vmem>>, %arg5: memref<1x8xf32, #tpu.memory_space<vmem>>, %arg6: memref<15x8xf32, #tpu.memory_space<vmem>>, %arg7: memref<16x16xf32, #tpu.memory_space<vmem>>) attributes {dimension_semantics = [], scalar_prefetch = 0 : i64, scratch_operands = 1 : i64, tpu.core_type = #tpu.core_type<tc>} {
    %c0 = arith.constant 0 : index
    %0 = memref.load %arg0[%c0] : memref<16xi32, #tpu.memory_space<smem>>
    %1 = arith.index_cast %0 : i32 to index
    %c0_0 = arith.constant 0 : index
    %2 = vector.load %arg1[%1, %c0_0] : memref<50x16xf32, #tpu.memory_space<vmem>>, vector<1x16xf32>
    %c0_1 = arith.constant 0 : index
    %c0_2 = arith.constant 0 : index
    %3 = vector.load %arg7[%c0_1, %c0_2] : memref<16x16xf32, #tpu.memory_space<vmem>>, vector<1x16xf32>
    tpu.vector_store %arg7[%c0_1, %c0_2], %2 {strides = array<i32>} : memref<16x16xf32, #tpu.memory_space<vmem>>, vector<1x16xf32>,
    %c1 = arith.constant 1 : index
    %4 = memref.load %arg0[%c1] : memref<16xi32, #tpu.memory_space<smem>>
    %5 = arith.index_cast %4 : i32 to index
    %c0_3 = arith.constant 0 : index
    %6 = vector.load %arg1[%5, %c0_3] : memref<50x16xf32, #tpu.memory_space<vmem>>, vector<1x16xf32>
    %c1_4 = arith.constant 1 : index
    %c0_5 = arith.constant 0 : index
    %7 = vector.load %arg7[%c1_4, %c0_5] : memref<16x16xf32, #tpu.memory_space<vmem>>, vector<1x16xf32>
    tpu.vector_store %arg7[%c1_4, %c0_5], %6 {strides = array<i32>} : memref<16x16xf32, #tpu.memory_space<vmem>>, vector<1x16xf32>,
    %c2 = arith.constant 2 : index
    %8 = memref.load %arg0[%c2] : memref<16xi32, #tpu.memory_space<smem>>
    %9 = arith.index_cast %8 : i32 to index
    %c0_6 = arith.constant 0 : index
    %10 = vector.load %arg1[%9, %c0_6] : memref<50x16xf32, #tpu.memory_space<vmem>>, vector<1x16xf32>
    %c2_7 = arith.constant 2 : index
    %c0_8 = arith.constant 0 : index
    %11 = vector.load %arg7[%c2_7, %c0_8] : memref<16x16xf32, #tpu.memory_space<vmem>>, vector<1x16xf32>
    tpu.vector_store %arg7[%c2_7, %c0_8], %10 {strides = array<i32>} : memref<16x16xf32, #tpu.memory_space<vmem>>, vector<1x16xf32>,
    %c3 = arith.constant 3 : index
    %12 = memref.load %arg0[%c3] : memref<16xi32, #tpu.memory_space<smem>>
    %13 = arith.index_cast %12 : i32 to index
    %c0_9 = arith.constant 0 : index
    %14 = vector.load %arg1[%13, %c0_9] : memref<50x16xf32, #tpu.memory_space<vmem>>, vector<1x16xf32>
    %c3_10 = arith.constant 3 : index
    %c0_11 = arith.constant 0 : index
    %15 = vector.load %arg7[%c3_10, %c0_11] : memref<16x16xf32, #tpu.memory_space<vmem>>, vector<1x16xf32>
    tpu.vector_store %arg7[%c3_10, %c0_11], %14 {strides = array<i32>} : memref<16x16xf32, #tpu.memory_space<vmem>>, vector<1x16xf32>,
    %c4 = arith.constant 4 : index
    %16 = memref.load %arg0[%c4] : memref<16xi32, #tpu.memory_space<smem>>
    %17 = arith.index_cast %16 : i32 to index
    %c0_12 = arith.constant 0 : index
    %18 = vector.load %arg1[%17, %c0_12] : memref<50x16xf32, #tpu.memory_space<vmem>>, vector<1x16xf32>
    %c4_13 = arith.constant 4 : index
    %c0_14 = arith.constant 0 : index
    %19 = vector.load %arg7[%c4_13, %c0_14] : memref<16x16xf32, #tpu.memory_space<vmem>>, vector<1x16xf32>
    tpu.vector_store %arg7[%c4_13, %c0_14], %18 {strides = array<i32>} : memref<16x16xf32, #tpu.memory_space<vmem>>, vector<1x16xf32>,
    %c5 = arith.constant 5 : index
    %20 = memref.load %arg0[%c5] : memref<16xi32, #tpu.memory_space<smem>>
    %21 = arith.index_cast %20 : i32 to index
    %c0_15 = arith.constant 0 : index
    %22 = vector.load %arg1[%21, %c0_15] : memref<50x16xf32, #tpu.memory_space<vmem>>, vector<1x16xf32>
    %c5_16 = arith.constant 5 : index
    %c0_17 = arith.constant 0 : index
    %23 = vector.load %arg7[%c5_16, %c0_17] : memref<16x16xf32, #tpu.memory_space<vmem>>, vector<1x16xf32>
    tpu.vector_store %arg7[%c5_16, %c0_17], %22 {strides = array<i32>} : memref<16x16xf32, #tpu.memory_space<vmem>>, vector<1x16xf32>,
    %c6 = arith.constant 6 : index
    %24 = memref.load %arg0[%c6] : memref<16xi32, #tpu.memory_space<smem>>
    %25 = arith.index_cast %24 : i32 to index
    %c0_18 = arith.constant 0 : index
    %26 = vector.load %arg1[%25, %c0_18] : memref<50x16xf32, #tpu.memory_space<vmem>>, vector<1x16xf32>
    %c6_19 = arith.constant 6 : index
    %c0_20 = arith.constant 0 : index
    %27 = vector.load %arg7[%c6_19, %c0_20] : memref<16x16xf32, #tpu.memory_space<vmem>>, vector<1x16xf32>
    tpu.vector_store %arg7[%c6_19, %c0_20], %26 {strides = array<i32>} : memref<16x16xf32, #tpu.memory_space<vmem>>, vector<1x16xf32>,
    %c7 = arith.constant 7 : index
    %28 = memref.load %arg0[%c7] : memref<16xi32, #tpu.memory_space<smem>>
    %29 = arith.index_cast %28 : i32 to index
    %c0_21 = arith.constant 0 : index
    %30 = vector.load %arg1[%29, %c0_21] : memref<50x16xf32, #tpu.memory_space<vmem>>, vector<1x16xf32>
    %c7_22 = arith.constant 7 : index
    %c0_23 = arith.constant 0 : index
    %31 = vector.load %arg7[%c7_22, %c0_23] : memref<16x16xf32, #tpu.memory_space<vmem>>, vector<1x16xf32>
    tpu.vector_store %arg7[%c7_22, %c0_23], %30 {strides = array<i32>} : memref<16x16xf32, #tpu.memory_space<vmem>>, vector<1x16xf32>,
    %c8 = arith.constant 8 : index
    %32 = memref.load %arg0[%c8] : memref<16xi32, #tpu.memory_space<smem>>
    %33 = arith.index_cast %32 : i32 to index
    %c0_24 = arith.constant 0 : index
    %34 = vector.load %arg1[%33, %c0_24] : memref<50x16xf32, #tpu.memory_space<vmem>>, vector<1x16xf32>
    %c8_25 = arith.constant 8 : index
    %c0_26 = arith.constant 0 : index
    %35 = vector.load %arg7[%c8_25, %c0_26] : memref<16x16xf32, #tpu.memory_space<vmem>>, vector<1x16xf32>
    tpu.vector_store %arg7[%c8_25, %c0_26], %34 {strides = array<i32>} : memref<16x16xf32, #tpu.memory_space<vmem>>, vector<1x16xf32>,
    %c9 = arith.constant 9 : index
    %36 = memref.load %arg0[%c9] : memref<16xi32, #tpu.memory_space<smem>>
    %37 = arith.index_cast %36 : i32 to index
    %c0_27 = arith.constant 0 : index
    %38 = vector.load %arg1[%37, %c0_27] : memref<50x16xf32, #tpu.memory_space<vmem>>, vector<1x16xf32>
    %c9_28 = arith.constant 9 : index
    %c0_29 = arith.constant 0 : index
    %39 = vector.load %arg7[%c9_28, %c0_29] : memref<16x16xf32, #tpu.memory_space<vmem>>, vector<1x16xf32>
    tpu.vector_store %arg7[%c9_28, %c0_29], %38 {strides = array<i32>} : memref<16x16xf32, #tpu.memory_space<vmem>>, vector<1x16xf32>,
    %c10 = arith.constant 10 : index
    %40 = memref.load %arg0[%c10] : memref<16xi32, #tpu.memory_space<smem>>
    %41 = arith.index_cast %40 : i32 to index
    %c0_30 = arith.constant 0 : index
    %42 = vector.load %arg1[%41, %c0_30] : memref<50x16xf32, #tpu.memory_space<vmem>>, vector<1x16xf32>
    %c10_31 = arith.constant 10 : index
    %c0_32 = arith.constant 0 : index
    %43 = vector.load %arg7[%c10_31, %c0_32] : memref<16x16xf32, #tpu.memory_space<vmem>>, vector<1x16xf32>
    tpu.vector_store %arg7[%c10_31, %c0_32], %42 {strides = array<i32>} : memref<16x16xf32, #tpu.memory_space<vmem>>, vector<1x16xf32>,
    %c11 = arith.constant 11 : index
    %44 = memref.load %arg0[%c11] : memref<16xi32, #tpu.memory_space<smem>>
    %45 = arith.index_cast %44 : i32 to index
    %c0_33 = arith.constant 0 : index
    %46 = vector.load %arg1[%45, %c0_33] : memref<50x16xf32, #tpu.memory_space<vmem>>, vector<1x16xf32>
    %c11_34 = arith.constant 11 : index
    %c0_35 = arith.constant 0 : index
    %47 = vector.load %arg7[%c11_34, %c0_35] : memref<16x16xf32, #tpu.memory_space<vmem>>, vector<1x16xf32>
    tpu.vector_store %arg7[%c11_34, %c0_35], %46 {strides = array<i32>} : memref<16x16xf32, #tpu.memory_space<vmem>>, vector<1x16xf32>,
    %c12 = arith.constant 12 : index
    %48 = memref.load %arg0[%c12] : memref<16xi32, #tpu.memory_space<smem>>
    %49 = arith.index_cast %48 : i32 to index
    %c0_36 = arith.constant 0 : index
    %50 = vector.load %arg1[%49, %c0_36] : memref<50x16xf32, #tpu.memory_space<vmem>>, vector<1x16xf32>
    %c12_37 = arith.constant 12 : index
    %c0_38 = arith.constant 0 : index
    %51 = vector.load %arg7[%c12_37, %c0_38] : memref<16x16xf32, #tpu.memory_space<vmem>>, vector<1x16xf32>
    tpu.vector_store %arg7[%c12_37, %c0_38], %50 {strides = array<i32>} : memref<16x16xf32, #tpu.memory_space<vmem>>, vector<1x16xf32>,
    %c13 = arith.constant 13 : index
    %52 = memref.load %arg0[%c13] : memref<16xi32, #tpu.memory_space<smem>>
    %53 = arith.index_cast %52 : i32 to index
    %c0_39 = arith.constant 0 : index
    %54 = vector.load %arg1[%53, %c0_39] : memref<50x16xf32, #tpu.memory_space<vmem>>, vector<1x16xf32>
    %c13_40 = arith.constant 13 : index
    %c0_41 = arith.constant 0 : index
    %55 = vector.load %arg7[%c13_40, %c0_41] : memref<16x16xf32, #tpu.memory_space<vmem>>, vector<1x16xf32>
    tpu.vector_store %arg7[%c13_40, %c0_41], %54 {strides = array<i32>} : memref<16x16xf32, #tpu.memory_space<vmem>>, vector<1x16xf32>,
    %c14 = arith.constant 14 : index
    %56 = memref.load %arg0[%c14] : memref<16xi32, #tpu.memory_space<smem>>
    %57 = arith.index_cast %56 : i32 to index
    %c0_42 = arith.constant 0 : index
    %58 = vector.load %arg1[%57, %c0_42] : memref<50x16xf32, #tpu.memory_space<vmem>>, vector<1x16xf32>
    %c14_43 = arith.constant 14 : index
    %c0_44 = arith.constant 0 : index
    %59 = vector.load %arg7[%c14_43, %c0_44] : memref<16x16xf32, #tpu.memory_space<vmem>>, vector<1x16xf32>
    tpu.vector_store %arg7[%c14_43, %c0_44], %58 {strides = array<i32>} : memref<16x16xf32, #tpu.memory_space<vmem>>, vector<1x16xf32>,
    %c15 = arith.constant 15 : index
    %60 = memref.load %arg0[%c15] : memref<16xi32, #tpu.memory_space<smem>>
    %61 = arith.index_cast %60 : i32 to index
    %c0_45 = arith.constant 0 : index
    %62 = vector.load %arg1[%61, %c0_45] : memref<50x16xf32, #tpu.memory_space<vmem>>, vector<1x16xf32>
    %c15_46 = arith.constant 15 : index
    %c0_47 = arith.constant 0 : index
    %63 = vector.load %arg7[%c15_46, %c0_47] : memref<16x16xf32, #tpu.memory_space<vmem>>, vector<1x16xf32>
    tpu.vector_store %arg7[%c15_46, %c0_47], %62 {strides = array<i32>} : memref<16x16xf32, #tpu.memory_space<vmem>>, vector<1x16xf32>,
    %c0_48 = arith.constant 0 : index
    %c0_49 = arith.constant 0 : index
    %64 = vector.load %arg7[%c0_48, %c0_49] : memref<16x16xf32, #tpu.memory_space<vmem>>, vector<16x16xf32>
    %65 = vector.extract_strided_slice %64 {offsets = [0, 0], sizes = [15, 16], strides = [1, 1]} : vector<16x16xf32> to vector<15x16xf32>
    %c0_50 = arith.constant 0 : index
    %c0_51 = arith.constant 0 : index
    %c0_52 = arith.constant 0 : index
    %66 = vector.load %arg2[%c0_50, %c0_51, %c0_52] : memref<2x16x32xf32, #tpu.memory_space<vmem>>, vector<1x16x32xf32>
    %67 = vector.shape_cast %66 : vector<1x16x32xf32> to vector<16x32xf32>
    %cst = arith.constant dense<0.000000e+00> : vector<15x32xf32>
    %68 = tpu.matmul %65, %67, %cst {dimension_numbers = #tpu.dot_dimension_numbers<[1], [0], [0], [1], [0, 0, 1, 1], [], []>} : vector<15x16xf32>, vector<16x32xf32>, vector<15x32xf32> -> vector<15x32xf32>
    %69 = vector.extract_strided_slice %64 {offsets = [1, 0], sizes = [15, 16], strides = [1, 1]} : vector<16x16xf32> to vector<15x16xf32>
    %c1_53 = arith.constant 1 : index
    %c0_54 = arith.constant 0 : index
    %c0_55 = arith.constant 0 : index
    %70 = vector.load %arg2[%c1_53, %c0_54, %c0_55] : memref<2x16x32xf32, #tpu.memory_space<vmem>>, vector<1x16x32xf32>
    %71 = vector.shape_cast %70 : vector<1x16x32xf32> to vector<16x32xf32>
    %cst_56 = arith.constant dense<0.000000e+00> : vector<15x32xf32>
    %72 = tpu.matmul %69, %71, %cst_56 {dimension_numbers = #tpu.dot_dimension_numbers<[1], [0], [0], [1], [0, 0, 1, 1], [], []>} : vector<15x16xf32>, vector<16x32xf32>, vector<15x32xf32> -> vector<15x32xf32>
    %73 = arith.addf %68, %72 : vector<15x32xf32>
    %c0_57 = arith.constant 0 : index
    %c0_58 = arith.constant 0 : index
    %74 = vector.load %arg3[%c0_57, %c0_58] : memref<1x32xf32, #tpu.memory_space<vmem>>, vector<1x32xf32>
    %75 = vector.broadcast %74 : vector<1x32xf32> to vector<15x32xf32>
    %76 = arith.addf %73, %75 : vector<15x32xf32>
    %cst_59 = arith.constant 0.000000e+00 : f32
    %77 = vector.broadcast %cst_59 : f32 to vector<15x32xf32>
    %78 = arith.maximumf %76, %77 : vector<15x32xf32>
    %c0_60 = arith.constant 0 : index
    %c0_61 = arith.constant 0 : index
    %79 = vector.load %arg4[%c0_60, %c0_61] : memref<32x8xf32, #tpu.memory_space<vmem>>, vector<32x8xf32>
    %cst_62 = arith.constant dense<0.000000e+00> : vector<15x8xf32>
    %80 = tpu.matmul %78, %79, %cst_62 {dimension_numbers = #tpu.dot_dimension_numbers<[1], [0], [0], [1], [0, 0, 1, 1], [], []>} : vector<15x32xf32>, vector<32x8xf32>, vector<15x8xf32> -> vector<15x8xf32>
    %c0_63 = arith.constant 0 : index
    %c0_64 = arith.constant 0 : index
    %81 = vector.load %arg5[%c0_63, %c0_64] : memref<1x8xf32, #tpu.memory_space<vmem>>, vector<1x8xf32>
    %82 = vector.broadcast %81 : vector<1x8xf32> to vector<15x8xf32>
    %83 = arith.addf %80, %82 : vector<15x8xf32>
    %cst_65 = arith.constant dense<0xFF800000> : vector<15xf32>
    %84 = vector.multi_reduction <maximumf>, %83, %cst_65 [1] : vector<15x8xf32> to vector<15xf32>
    %85 = vector.shape_cast %84 : vector<15xf32> to vector<15x1xf32>
    %86 = vector.broadcast %85 : vector<15x1xf32> to vector<15x8xf32>
    %87 = arith.subf %83, %86 : vector<15x8xf32>
    %88 = math.exp %87 : vector<15x8xf32>
    %cst_66 = arith.constant dense<0.000000e+00> : vector<15xf32>
    %89 = vector.multi_reduction <add>, %88, %cst_66 [1] : vector<15x8xf32> to vector<15xf32>
    %90 = vector.shape_cast %89 : vector<15xf32> to vector<15x1xf32>
    %91 = math.log %90 : vector<15x1xf32>
    %92 = vector.broadcast %91 : vector<15x1xf32> to vector<15x8xf32>
    %93 = arith.subf %87, %92 : vector<15x8xf32>
    %c0_67 = arith.constant 0 : index
    %c0_68 = arith.constant 0 : index
    %94 = vector.load %arg6[%c0_67, %c0_68] : memref<15x8xf32, #tpu.memory_space<vmem>>, vector<15x8xf32>
    tpu.vector_store %arg6[%c0_67, %c0_68], %93 {strides = array<i32>} : memref<15x8xf32, #tpu.memory_space<vmem>>, vector<15x8xf32>,
    return
  }
}

</mosaic_0001>

<llo_original>
// kernel: cnn_model_forward.1
$region0: #{cnn_model_forward.1}
  #allocation0 [shape = 'u32[]', space=smem, size = 0x4, offset = 0x4, fixed_abs, tag = 'smem constant byte address 0x4 - core index']
  #allocation1 [shape = 'u32[144,128]{1,0:T(1,128)}', space=vmem, size = 0x12000, scoped, tag = 'internal scratch']
  #allocation2 [shape = 'f32[16,16]{1,0:T(8,128)}', space=vmem, size = 0x2000, scoped, tag = 'scratch operand']
  %s0 = inlined_call_operand.vmem [shape: s32[16], index: 0, kind: input, shape index: {}]
  %s1 = inlined_call_operand.vmem [shape: f32[50,16], index: 1, kind: input, shape index: {}]
  %s2 = inlined_call_operand.vmem [shape: f32[2,16,32], index: 2, kind: input, shape index: {}]
  %s3 = inlined_call_operand.vmem [shape: f32[1,32], index: 3, kind: input, shape index: {}]
  %s4 = inlined_call_operand.vmem [shape: f32[32,8], index: 4, kind: input, shape index: {}]
  %s5 = inlined_call_operand.vmem [shape: f32[1,8], index: 5, kind: input, shape index: {}]
  %s6 = inlined_call_operand.vmem [shape: f32[15,8], index: 6, kind: output, shape index: {}]
  %s7 = sld [smem:[#allocation0]]
  $region38: #{cnn_model_forward.1} parent=0
    _
  %s9 = ssub.s32 1, %s7
  %s10 = scalar_select 0, %s9, %s7
  $region1: #{cnn_model_forward.1} parent=0
    #allocation3 [shape = 'u8[512]{0}', space=smem, size = 0x200, scoped, tag = 'input window, operand 0, single buffered']
    #allocation4 [shape = 's32[1]{0}', space=sflag, size = 0x4, scoped, tag = 'scoped memory for cnn_model_forward.1']
    %11 = vsyncpa [#allocation4], 0
    // Predicated region
    $region2: #{cnn_model_forward.1} parent=1 // pred_check
      _
    $region3: #{cnn_model_forward.1} parent=1 // pred_check_branch
      %13 = sbr.rel (0) target = $region5
    $region4: #{cnn_model_forward.1} parent=1 // pred_region
      %s15 = ssub.s32 16, 16
      %16 = vsyncadd [#allocation4], %s15
      %s18 = sshll.u32 %s0, 4
      %s19 = int_to_ptr.vmem [resolvable:$true] %s18
      %21 = dma.vmem_to_smem %s19, 16, [#allocation3], [#allocation4]
    $region5: #{cnn_model_forward.1} parent=1 // pred_fallthru
      _
    // Predicated region
    $region6: #{cnn_model_forward.1} parent=1 // pred_check
      _
    $region7: #{cnn_model_forward.1} parent=1 // pred_check_branch
      %23 = sbr.rel (0) target = $region9
    $region8: #{cnn_model_forward.1} parent=1 // pred_region
      _
    $region9: #{cnn_model_forward.1} parent=1 // pred_fallthru
      _
    // Predicated region
    $region10: #{cnn_model_forward.1} parent=1 // pred_check
      _
    $region11: #{cnn_model_forward.1} parent=1 // pred_check_branch
      %25 = sbr.rel (0) target = $region13
    $region12: #{cnn_model_forward.1} parent=1 // pred_region
      _
    $region13: #{cnn_model_forward.1} parent=1 // pred_fallthru
      _
    // Predicated region
    $region14: #{cnn_model_forward.1} parent=1 // pred_check
      _
    $region15: #{cnn_model_forward.1} parent=1 // pred_check_branch
      %27 = sbr.rel (0) target = $region17
    $region16: #{cnn_model_forward.1} parent=1 // pred_region
      _
    $region17: #{cnn_model_forward.1} parent=1 // pred_fallthru
      _
    // Predicated region
    $region18: #{cnn_model_forward.1} parent=1 // pred_check
      _
    $region19: #{cnn_model_forward.1} parent=1 // pred_check_branch
      %29 = sbr.rel (0) target = $region21
    $region20: #{cnn_model_forward.1} parent=1 // pred_region
      _
    $region21: #{cnn_model_forward.1} parent=1 // pred_fallthru
      _
    // Predicated region
    $region22: #{cnn_model_forward.1} parent=1 // pred_check
      _
    $region23: #{cnn_model_forward.1} parent=1 // pred_check_branch
      %31 = sbr.rel (0) target = $region25
    $region24: #{cnn_model_forward.1} parent=1 // pred_region
      _
    $region25: #{cnn_model_forward.1} parent=1 // pred_fallthru
      _
    // Predicated region
    $region26: #{cnn_model_forward.1} parent=1 // pred_check
      _
    $region27: #{cnn_model_forward.1} parent=1 // pred_check_branch
      %33 = sbr.rel (0) target = $region29
    $region28: #{cnn_model_forward.1} parent=1 // pred_region
      %34 = dma.done [#allocation4], 16
    $region29: #{cnn_model_forward.1} parent=1 // pred_fallthru
      _
    %35 = sfence
    %s36 = sld [smem:[#allocation3]]
    %s37 = scalar_lea.vmem %s1, %s36
    %v38 = vld [vmem:[%s37] sm:$0x1]
    %vm39 = vcmask 122880
    %40 = vst.msk [vmem:[#allocation2] sm:$0x1] %vm39, %v38
    %s41 = sld [smem:[#allocation3 + $0x1]]
    %s42 = scalar_lea.vmem %s1, %s41
    %v43 = vld [vmem:[%s42] sm:$0x1]
    %44 = vst.msk [vmem:[#allocation2 + $0x1] sm:$0x1] %vm39, %v43
    %s45 = sld [smem:[#allocation3 + $0x2]]
    %s46 = scalar_lea.vmem %s1, %s45
    %v47 = vld [vmem:[%s46] sm:$0x1]
    %48 = vst.msk [vmem:[#allocation2 + $0x2] sm:$0x1] %vm39, %v47
    %s49 = sld [smem:[#allocation3 + $0x3]]
    %s50 = scalar_lea.vmem %s1, %s49
    %v51 = vld [vmem:[%s50] sm:$0x1]
    %52 = vst.msk [vmem:[#allocation2 + $0x3] sm:$0x1] %vm39, %v51
    %s53 = sld [smem:[#allocation3 + $0x4]]
    %s54 = scalar_lea.vmem %s1, %s53
    %v55 = vld [vmem:[%s54] sm:$0x1]
    %56 = vst.msk [vmem:[#allocation2 + $0x4] sm:$0x1] %vm39, %v55
    %s57 = sld [smem:[#allocation3 + $0x5]]
    %s58 = scalar_lea.vmem %s1, %s57
    %v59 = vld [vmem:[%s58] sm:$0x1]
    %60 = vst.msk [vmem:[#allocation2 + $0x5] sm:$0x1] %vm39, %v59
    %s61 = sld [smem:[#allocation3 + $0x6]]
    %s62 = scalar_lea.vmem %s1, %s61
    %v63 = vld [vmem:[%s62] sm:$0x1]
    %64 = vst.msk [vmem:[#allocation2 + $0x6] sm:$0x1] %vm39, %v63
    %s65 = sld [smem:[#allocation3 + $0x7]]
    %s66 = scalar_lea.vmem %s1, %s65
    %v67 = vld [vmem:[%s66] sm:$0x1]
    %68 = vst.msk [vmem:[#allocation2 + $0x7] sm:$0x1] %vm39, %v67
    %s69 = sld [smem:[#allocation3 + $0x8]]
    %s70 = scalar_lea.vmem %s1, %s69
    %v71 = vld [vmem:[%s70] sm:$0x1]
    %72 = vst.msk [vmem:[#allocation2 + $0x8] sm:$0x1] %vm39, %v71
    %s73 = sld [smem:[#allocation3 + $0x9]]
    %s74 = scalar_lea.vmem %s1, %s73
    %v75 = vld [vmem:[%s74] sm:$0x1]
    %76 = vst.msk [vmem:[#allocation2 + $0x9] sm:$0x1] %vm39, %v75
    %s77 = sld [smem:[#allocation3 + $0xa]]
    %s78 = scalar_lea.vmem %s1, %s77
    %v79 = vld [vmem:[%s78] sm:$0x1]
    %80 = vst.msk [vmem:[#allocation2 + $0xa] sm:$0x1] %vm39, %v79
    %s81 = sld [smem:[#allocation3 + $0xb]]
    %s82 = scalar_lea.vmem %s1, %s81
    %v83 = vld [vmem:[%s82] sm:$0x1]
    %84 = vst.msk [vmem:[#allocation2 + $0xb] sm:$0x1] %vm39, %v83
    %s85 = sld [smem:[#allocation3 + $0xc]]
    %s86 = scalar_lea.vmem %s1, %s85
    %v87 = vld [vmem:[%s86] sm:$0x1]
    %88 = vst.msk [vmem:[#allocation2 + $0xc] sm:$0x1] %vm39, %v87
    %s89 = sld [smem:[#allocation3 + $0xd]]
    %s90 = scalar_lea.vmem %s1, %s89
    %v91 = vld [vmem:[%s90] sm:$0x1]
    %92 = vst.msk [vmem:[#allocation2 + $0xd] sm:$0x1] %vm39, %v91
    %s93 = sld [smem:[#allocation3 + $0xe]]
    %s94 = scalar_lea.vmem %s1, %s93
    %v95 = vld [vmem:[%s94] sm:$0x1]
    %96 = vst.msk [vmem:[#allocation2 + $0xe] sm:$0x1] %vm39, %v95
    %s97 = sld [smem:[#allocation3 + $0xf]]
    %s98 = scalar_lea.vmem %s1, %s97
    %v99 = vld [vmem:[%s98] sm:$0x1]
    %100 = vst.msk [vmem:[#allocation2 + $0xf] sm:$0x1] %vm39, %v99
    %v101 = vld [vmem:[#allocation2] sm:$0xff]
    %v102 = vld [vmem:[#allocation2 + $0x8] sm:$0xff]
    %v103 = vld [vmem:[%s2] sm:$0xff]
    %v104 = vld [vmem:[%s2 + $0x8] sm:$0xff]
    %s105 = scalar_lea.vmem %s2, 16
    %v106 = vld [vmem:[%s105] sm:$0xff]
    %v107 = vld [vmem:[%s105 + $0x8] sm:$0xff]
    %vm110 = vcmask 1046528
    %v111 = vrot.slane %v101, 1
    %v112 = vrot.slane %v102, 1
    %v113 = vsel %vm110, %v111, %v112
    %vm114 = vcmask 130048
    %v115 = vsel %vm114, %v113, 0
    %v117 = vsel %vm114, %v112, 0
    %119 = vmatprep.subr.mxu0 0.0
    %120 = vmatpush1.msra.mxu0 %v106
    %121 = vmatprep.subr.mxu0 0.0
    %122 = vmatpush1.msra.mxu0 %v107
    %123 = vmatprep.subr.mxu0 0.0
    %124 = vmatpush1.msra.mxu0 0.0
    %125 = vmatprep.subr.mxu0 0.0
    %126 = vmatpush1.msra.mxu0 0.0
    %127 = vmatprep.subr.mxu0 0.0
    %128 = vmatpush1.msra.mxu0 0.0
    %129 = vmatprep.subr.mxu0 0.0
    %130 = vmatpush1.msra.mxu0 0.0
    %131 = vmatprep.subr.mxu0 0.0
    %132 = vmatpush1.msra.mxu0 0.0
    %133 = vmatprep.subr.mxu0 0.0
    %134 = vmatpush1.msra.mxu0 0.0
    %135 = vmatprep.subr.mxu0 0.0
    %136 = vmatpush1.msra.mxu0 0.0
    %137 = vmatprep.subr.mxu0 0.0
    %138 = vmatpush1.msra.mxu0 0.0
    %139 = vmatprep.subr.mxu0 0.0
    %140 = vmatpush1.msra.mxu0 0.0
    %141 = vmatprep.subr.mxu0 0.0
    %142 = vmatpush1.msra.mxu0 0.0
    %143 = vmatprep.subr.mxu0 0.0
    %144 = vmatpush1.msra.mxu0 0.0
    %145 = vmatprep.subr.mxu0 0.0
    %146 = vmatpush1.msra.mxu0 0.0
    %147 = vmatprep.subr.mxu0 0.0
    %148 = vmatpush1.msra.mxu0 0.0
    %149 = vmatprep.subr.mxu0 0.0
    %150 = vmatpush1.msra.mxu0 0.0
    %151 = vmatprep.subr.mxu0 0.0
    %152 = vmatpush1.msra.mxu0 0.0
    %153 = vmatprep.subr.mxu0 0.0
    %154 = vmatpush1.msra.mxu0 0.0
    %155 = vmatprep.subr.mxu0 0.0
    %156 = vmatpush1.msra.mxu0 0.0
    %157 = vmatprep.subr.mxu0 0.0
    %158 = vmatpush1.msra.mxu0 0.0
    %159 = vmatprep.subr.mxu0 0.0
    %160 = vmatpush1.msra.mxu0 0.0
    %161 = vmatprep.subr.mxu0 0.0
    %162 = vmatpush1.msra.mxu0 0.0
    %163 = vmatprep.subr.mxu0 0.0
    %164 = vmatpush1.msra.mxu0 0.0
    %165 = vmatprep.subr.mxu0 0.0
    %166 = vmatpush1.msra.mxu0 0.0
    %167 = vmatprep.subr.mxu0 0.0
    %168 = vmatpush1.msra.mxu0 0.0
    %169 = vmatprep.subr.mxu0 0.0
    %170 = vmatpush1.msra.mxu0 0.0
    %171 = vmatprep.subr.mxu0 0.0
    %172 = vmatpush1.msra.mxu0 0.0
    %173 = vmatprep.subr.mxu0 0.0
    %174 = vmatpush1.msra.mxu0 0.0
    %175 = vmatprep.subr.mxu0 0.0
    %176 = vmatpush1.msra.mxu0 0.0
    %177 = vmatprep.subr.mxu0 0.0
    %178 = vmatpush1.msra.mxu0 0.0
    %179 = vmatprep.subr.mxu0 0.0
    %180 = vmatpush1.msra.mxu0 0.0
    %181 = vmatprep.subr.mxu0 0.0
    %182 = vmatpush1.msra.mxu0 0.0
    %183 = vmatprep.mubr.f32.mxu0 0.0
    %184 = vmatmul.mubr.f32.gmra.mrb[0].mxu0 %v115
    %v185 = vpop.f32.mrb[0].mxu0
    %v186 = vadd.f32 0.0, %v185
    %v187 = vpop.f32.mrb[0].mxu0
    %188 = vmatprep.mubr.f32.mxu0 0.0
    %189 = vmatmul.mubr.f32.gmra.mrb[0].mxu0 %v117
    %v190 = vpop.f32.mrb[0].mxu0
    %v191 = vadd.f32 0.0, %v190
    %v192 = vpop.f32.mrb[0].mxu0
    %193 = vdwg.mxu0
    %v194 = vsel %vm114, %v101, 0
    %v196 = vsel %vm114, %v102, 0
    %198 = vmatprep.subr.mxu0 0.0
    %199 = vmatpush1.msra.mxu0 %v103
    %200 = vmatprep.subr.mxu0 0.0
    %201 = vmatpush1.msra.mxu0 %v104
    %202 = vmatprep.subr.mxu0 0.0
    %203 = vmatpush1.msra.mxu0 0.0
    %204 = vmatprep.subr.mxu0 0.0
    %205 = vmatpush1.msra.mxu0 0.0
    %206 = vmatprep.subr.mxu0 0.0
    %207 = vmatpush1.msra.mxu0 0.0
    %208 = vmatprep.subr.mxu0 0.0
    %209 = vmatpush1.msra.mxu0 0.0
    %210 = vmatprep.subr.mxu0 0.0
    %211 = vmatpush1.msra.mxu0 0.0
    %212 = vmatprep.subr.mxu0 0.0
    %213 = vmatpush1.msra.mxu0 0.0
    %214 = vmatprep.subr.mxu0 0.0
    %215 = vmatpush1.msra.mxu0 0.0
    %216 = vmatprep.subr.mxu0 0.0
    %217 = vmatpush1.msra.mxu0 0.0
    %218 = vmatprep.subr.mxu0 0.0
    %219 = vmatpush1.msra.mxu0 0.0
    %220 = vmatprep.subr.mxu0 0.0
    %221 = vmatpush1.msra.mxu0 0.0
    %222 = vmatprep.subr.mxu0 0.0
    %223 = vmatpush1.msra.mxu0 0.0
    %224 = vmatprep.subr.mxu0 0.0
    %225 = vmatpush1.msra.mxu0 0.0
    %226 = vmatprep.subr.mxu0 0.0
    %227 = vmatpush1.msra.mxu0 0.0
    %228 = vmatprep.subr.mxu0 0.0
    %229 = vmatpush1.msra.mxu0 0.0
    %230 = vmatprep.subr.mxu0 0.0
    %231 = vmatpush1.msra.mxu0 0.0
    %232 = vmatprep.subr.mxu0 0.0
    %233 = vmatpush1.msra.mxu0 0.0
    %234 = vmatprep.subr.mxu0 0.0
    %235 = vmatpush1.msra.mxu0 0.0
    %236 = vmatprep.subr.mxu0 0.0
    %237 = vmatpush1.msra.mxu0 0.0
    %238 = vmatprep.subr.mxu0 0.0
    %239 = vmatpush1.msra.mxu0 0.0
    %240 = vmatprep.subr.mxu0 0.0
    %241 = vmatpush1.msra.mxu0 0.0
    %242 = vmatprep.subr.mxu0 0.0
    %243 = vmatpush1.msra.mxu0 0.0
    %244 = vmatprep.subr.mxu0 0.0
    %245 = vmatpush1.msra.mxu0 0.0
    %246 = vmatprep.subr.mxu0 0.0
    %247 = vmatpush1.msra.mxu0 0.0
    %248 = vmatprep.subr.mxu0 0.0
    %249 = vmatpush1.msra.mxu0 0.0
    %250 = vmatprep.subr.mxu0 0.0
    %251 = vmatpush1.msra.mxu0 0.0
    %252 = vmatprep.subr.mxu0 0.0
    %253 = vmatpush1.msra.mxu0 0.0
    %254 = vmatprep.subr.mxu0 0.0
    %255 = vmatpush1.msra.mxu0 0.0
    %256 = vmatprep.subr.mxu0 0.0
    %257 = vmatpush1.msra.mxu0 0.0
    %258 = vmatprep.subr.mxu0 0.0
    %259 = vmatpush1.msra.mxu0 0.0
    %260 = vmatprep.subr.mxu0 0.0
    %261 = vmatpush1.msra.mxu0 0.0
    %262 = vmatprep.mubr.f32.mxu0 0.0
    %263 = vmatmul.mubr.f32.gmra.mrb[0].mxu0 %v194
    %v264 = vpop.f32.mrb[0].mxu0
    %v265 = vadd.f32 %v186, %v264
    %v266 = vpop.f32.mrb[0].mxu0
    %267 = vmatprep.mubr.f32.mxu0 0.0
    %268 = vmatmul.mubr.f32.gmra.mrb[0].mxu0 %v196
    %v269 = vpop.f32.mrb[0].mxu0
    %v270 = vadd.f32 %v191, %v269
    %v271 = vpop.f32.mrb[0].mxu0
    %272 = vdwg.mxu0
    %v273 = vld [vmem:[%s3] sm:$0x1]
    %v275 = vlaneseq
    %v276 = vshrl.u32 %v275, 7
    %v277 = vsub.s32 0, %v276
    %v278 = vrot.slane %v273, %v277
    %v280 = vadd.f32 %v265, %v278
    %v281 = vadd.f32 %v270, %v278
    %v282 = vmax.f32 %v280, 0.0
    %v283 = vmax.f32 %v281, 0.0
    %v284 = vld [vmem:[%s4] sm:$0xff]
    %v285 = vld [vmem:[%s4 + $0x8] sm:$0xff]
    %v286 = vld [vmem:[%s4 + $0x10] sm:$0xff]
    %v287 = vld [vmem:[%s4 + $0x18] sm:$0xff]
    %v288 = vld [vmem:[%s5] sm:$0x1]
    %v290 = vlaneseq
    %v291 = vshrl.u32 %v290, 7
    %v292 = vsub.s32 0, %v291
    %v293 = vrot.slane %v288, %v292
    %vm295 = vcmask 261120
    %v297 = vsel %vm295, %v282, 0
    %v300 = vsel %vm295, %v283, 0
    %302 = vmatprep.subr.mxu0 0.0
    %303 = vmatpush1.msra.mxu0 %v284
    %304 = vmatprep.subr.mxu0 0.0
    %305 = vmatpush1.msra.mxu0 %v285
    %306 = vmatprep.subr.mxu0 0.0
    %307 = vmatpush1.msra.mxu0 %v286
    %308 = vmatprep.subr.mxu0 0.0
    %309 = vmatpush1.msra.mxu0 %v287
    %310 = vmatprep.subr.mxu0 0.0
    %311 = vmatpush1.msra.mxu0 0.0
    %312 = vmatprep.subr.mxu0 0.0
    %313 = vmatpush1.msra.mxu0 0.0
    %314 = vmatprep.subr.mxu0 0.0
    %315 = vmatpush1.msra.mxu0 0.0
    %316 = vmatprep.subr.mxu0 0.0
    %317 = vmatpush1.msra.mxu0 0.0
    %318 = vmatprep.subr.mxu0 0.0
    %319 = vmatpush1.msra.mxu0 0.0
    %320 = vmatprep.subr.mxu0 0.0
    %321 = vmatpush1.msra.mxu0 0.0
    %322 = vmatprep.subr.mxu0 0.0
    %323 = vmatpush1.msra.mxu0 0.0
    %324 = vmatprep.subr.mxu0 0.0
    %325 = vmatpush1.msra.mxu0 0.0
    %326 = vmatprep.subr.mxu0 0.0
    %327 = vmatpush1.msra.mxu0 0.0
    %328 = vmatprep.subr.mxu0 0.0
    %329 = vmatpush1.msra.mxu0 0.0
    %330 = vmatprep.subr.mxu0 0.0
    %331 = vmatpush1.msra.mxu0 0.0
    %332 = vmatprep.subr.mxu0 0.0
    %333 = vmatpush1.msra.mxu0 0.0
    %334 = vmatprep.subr.mxu0 0.0
    %335 = vmatpush1.msra.mxu0 0.0
    %336 = vmatprep.subr.mxu0 0.0
    %337 = vmatpush1.msra.mxu0 0.0
    %338 = vmatprep.subr.mxu0 0.0
    %339 = vmatpush1.msra.mxu0 0.0
    %340 = vmatprep.subr.mxu0 0.0
    %341 = vmatpush1.msra.mxu0 0.0
    %342 = vmatprep.subr.mxu0 0.0
    %343 = vmatpush1.msra.mxu0 0.0
    %344 = vmatprep.subr.mxu0 0.0
    %345 = vmatpush1.msra.mxu0 0.0
    %346 = vmatprep.subr.mxu0 0.0
    %347 = vmatpush1.msra.mxu0 0.0
    %348 = vmatprep.subr.mxu0 0.0
    %349 = vmatpush1.msra.mxu0 0.0
    %350 = vmatprep.subr.mxu0 0.0
    %351 = vmatpush1.msra.mxu0 0.0
    %352 = vmatprep.subr.mxu0 0.0
    %353 = vmatpush1.msra.mxu0 0.0
    %354 = vmatprep.subr.mxu0 0.0
    %355 = vmatpush1.msra.mxu0 0.0
    %356 = vmatprep.subr.mxu0 0.0
    %357 = vmatpush1.msra.mxu0 0.0
    %358 = vmatprep.subr.mxu0 0.0
    %359 = vmatpush1.msra.mxu0 0.0
    %360 = vmatprep.subr.mxu0 0.0
    %361 = vmatpush1.msra.mxu0 0.0
    %362 = vmatprep.subr.mxu0 0.0
    %363 = vmatpush1.msra.mxu0 0.0
    %364 = vmatprep.subr.mxu0 0.0
    %365 = vmatpush1.msra.mxu0 0.0
    %366 = vmatprep.mubr.f32.mxu0 0.0
    %367 = vmatmul.mubr.f32.gmra.mrb[0].mxu0 %v297
    %v368 = vpop.f32.mrb[0].mxu0
    %v369 = vadd.f32 %v293, %v368
    %v370 = vpop.f32.mrb[0].mxu0
    %371 = vmatprep.mubr.f32.mxu0 0.0
    %372 = vmatmul.mubr.f32.gmra.mrb[0].mxu0 %v300
    %v373 = vpop.f32.mrb[0].mxu0
    %v374 = vadd.f32 %v293, %v373
    %v375 = vpop.f32.mrb[0].mxu0
    %376 = vdwg.mxu0
    %vm377 = vcmask 64512
    %v378 = vsel %vm377, %v369, -inf
    %379 = vmax.xlane.f32.xlu0 %v378
    %v380 = vpop.xlane.xlu0 %379
    %vm381 = vcmask 63488
    %v382 = vsel %vm381, %v374, -inf
    %383 = vmax.xlane.f32.xlu0 %v382
    %v384 = vpop.xlane.xlu0 %383
    %v385 = vsub.f32 %v369, %v380
    %v386 = vsub.f32 %v374, %v384
    %v387 = vmul.f32 %v385, 1.442695
    %v388 = vpow.pop %v387
    %v389 = vmul.f32 %v386, 1.442695
    %v390 = vpow.pop %v389
    %v391 = vsel %vm377, %v388, 0.0
    %392 = vadd.xlane.f32.xlu0 %v391
    %v393 = vpop.xlane.xlu0 %392
    %v394 = vsel %vm381, %v390, 0.0
    %395 = vadd.xlane.f32.xlu0 %v394
    %v396 = vpop.xlane.xlu0 %395
    %v397 = vlog2.pop %v393
    %v398 = vmul.f32 %v397, 0.6931472
    %v399 = vlog2.pop %v396
    %v400 = vmul.f32 %v399, 0.6931472
    %v401 = vsub.f32 %v385, %v398
    %v402 = vsub.f32 %v386, %v400
    %403 = vst.msk [vmem:[%s6] sm:$0xff] %vm377, %v401
    %404 = vst.msk [vmem:[%s6 + $0x8] sm:$0x7f] %vm381, %v402
    // Predicated region
    $region30: #{cnn_model_forward.1} parent=1 // pred_check
      _
    $region31: #{cnn_model_forward.1} parent=1 // pred_check_branch
      %406 = sbr.rel (0) target = $region33
    $region32: #{cnn_model_forward.1} parent=1 // pred_region
      _
    $region33: #{cnn_model_forward.1} parent=1 // pred_fallthru
      _
    // Predicated region
    $region34: #{cnn_model_forward.1} parent=1 // pred_check
      _
    $region35: #{cnn_model_forward.1} parent=1 // pred_check_branch
      %408 = sbr.rel (0) target = $region37
    $region36: #{cnn_model_forward.1} parent=1 // pred_region
      _
    $region37: #{cnn_model_forward.1} parent=1 // pred_fallthru
      _
    %409 = vsyncpa [#allocation4], 1

</llo_original>
